<compile_context>
chip_gen: v5e
topology: v5e:2x2
jax: 0.10.0
libtpu: 0.0.40
codegen_flags: <defaults>
</compile_context>

<pallas_src>
import numpy as np

import jax
import jax.numpy as jnp
from jax import lax
from jax.experimental import pallas as pl
from jax.experimental.pallas import tpu as pltpu


# ----------------------------------------------------------------------------
# Host-side helpers: banded conv weights and bilinear-upsample matrices.
# ----------------------------------------------------------------------------
def _upsample_matrix(n):
    """(2n, n) matrix U such that U @ x == 2x bilinear upsample, align_corners=True."""
    m = 2 * n
    if n == 1:
        return np.ones((m, 1), np.float32)
    pos = np.arange(m, dtype=np.float64) * (n - 1) / (m - 1)
    lo = np.clip(np.floor(pos).astype(np.int64), 0, n - 2)
    frac = (pos - lo).astype(np.float32)
    U = np.zeros((m, n), np.float32)
    U[np.arange(m), lo] += 1.0 - frac
    U[np.arange(m), lo + 1] += frac
    return U


def _banded_conv_weights(w_hwio, W):
    """w_hwio: (3, 3, Cin, Cout) -> (3, (W+2)*Cin, W*Cout) banded matrices.

    out[dy, (w+dx)*Cin + ci, w*Cout + co] = w_hwio[dy, dx, ci, co]
    so that a 'same' 3x3 conv (pad=1) becomes, per kernel row dy, one GEMM of the
    zero-padded, lane-flattened image rows against these matrices.
    """
    Cin, Cout = w_hwio.shape[2], w_hwio.shape[3]
    out = np.zeros((3, (W + 2) * Cin, W * Cout), np.float32)
    for dy in range(3):
        for dx in range(3):
            blk = w_hwio[dy, dx]
            for wcol in range(W):
                r0 = (wcol + dx) * Cin
                c0 = wcol * Cout
                out[dy, r0:r0 + Cin, c0:c0 + Cout] = blk
    return out


# ----------------------------------------------------------------------------
# Fused decoder level kernel:
#   FiLM -> zero halo pad -> 3x3 conv (+residual half) + bias + ReLU
#   -> 2x bilinear upsample (align_corners=True), all in VMEM.
# ----------------------------------------------------------------------------
def _make_level_kernel(P, H, W, C, Cout, has_res, apply_film):
    WCo = W * Cout

    def kernel(*refs):
        it = iter(refs)
        feat_ref = next(it)                                   # (P, H, W*C)      f32
        res_ref = next(it) if has_res else None               # (P, H, W*C)      f32
        scale_ref = next(it) if apply_film else None          # (P, W*C)         f32
        bias_ref = next(it) if apply_film else None           # (P, W*C)         f32
        wf_ref = next(it)                                     # (3,(W+2)*C,W*Co) bf16
        wr_ref = next(it) if has_res else None                # (3,(W+2)*C,W*Co) bf16
        bconv_ref = next(it)                                  # (1, W*Co)        f32
        bd_ref = next(it)                                     # (P*2H, P*H)      f32
        kw_ref = next(it)                                     # (W*Co, 2W*Co)    f32
        o_ref = next(it)                                      # (P, 2H, 2W*Co)   f32
        xpad_f = next(it)                                     # (P, H+2, (W+2)*C) bf16
        xpad_r = next(it) if has_res else None

        # --- FiLM (f32 on the VPU), then write into the zero-padded bf16 scratch ---
        x = feat_ref[...]
        if apply_film:
            x = x * scale_ref[...][:, None, :] + bias_ref[...][:, None, :]
        xpad_f[...] = jnp.zeros_like(xpad_f)
        xpad_f[:, 1:H + 1, C:(W + 1) * C] = x.astype(xpad_f.dtype)
        if has_res:
            xpad_r[...] = jnp.zeros_like(xpad_r)
            xpad_r[:, 1:H + 1, C:(W + 1) * C] = res_ref[...].astype(xpad_r.dtype)

        # --- 3x3 'same' conv as 3 (or 6) banded GEMMs, f32 accumulation ---
        acc = jnp.zeros((P * H, WCo), jnp.float32)
        for dy in range(3):
            lhs = xpad_f[:, dy:dy + H, :].reshape(P * H, (W + 2) * C)
            acc = acc + jnp.dot(lhs, wf_ref[dy], preferred_element_type=jnp.float32)
            if has_res:
                lhs_r = xpad_r[:, dy:dy + H, :].reshape(P * H, (W + 2) * C)
                acc = acc + jnp.dot(lhs_r, wr_ref[dy],
                                    preferred_element_type=jnp.float32)
        acc = jnp.maximum(acc + bconv_ref[...], 0.0)          # (P*H, W*Co)

        # --- exact 2x bilinear upsample (align_corners=True) as two static GEMMs ---
        th = jnp.dot(bd_ref[...], acc, preferred_element_type=jnp.float32)   # (P*2H, W*Co)
        out = jnp.dot(th, kw_ref[...], preferred_element_type=jnp.float32)   # (P*2H, 2W*Co)
        o_ref[...] = out.reshape(P, 2 * H, 2 * WCo).astype(o_ref.dtype)

    return kernel


def _fused_decoder_level(feat, res, scale, bias, wf_b, wr_b, bconv, bd, kw,
                         apply_film, H, W, C, Cout):
    """One decoder level, fully fused. feat: (P, H, W*C) -> (P, 2H, 2W*Cout)."""
    P = feat.shape[0]
    has_res = res is not None
    WC, WCo = W * C, W * Cout

    inputs = [feat]
    in_specs = [pl.BlockSpec((P, H, WC), lambda i: (0, 0, 0))]
    if has_res:
        inputs.append(res)
        in_specs.append(pl.BlockSpec((P, H, WC), lambda i: (0, 0, 0)))
    if apply_film:
        inputs += [scale, bias]
        in_specs += [pl.BlockSpec((P, WC), lambda i: (0, 0)),
                     pl.BlockSpec((P, WC), lambda i: (0, 0))]
    inputs.append(wf_b)
    in_specs.append(pl.BlockSpec((3, (W + 2) * C, WCo), lambda i: (0, 0, 0)))
    if has_res:
        inputs.append(wr_b)
        in_specs.append(pl.BlockSpec((3, (W + 2) * C, WCo), lambda i: (0, 0, 0)))
    inputs += [bconv, bd, kw]
    in_specs += [pl.BlockSpec((1, WCo), lambda i: (0, 0)),
                 pl.BlockSpec((2 * H * P, H * P), lambda i: (0, 0)),
                 pl.BlockSpec((WCo, 2 * WCo), lambda i: (0, 0))]

    scratch = [pltpu.VMEM((P, H + 2, (W + 2) * C), jnp.bfloat16)]
    if has_res:
        scratch.append(pltpu.VMEM((P, H + 2, (W + 2) * C), jnp.bfloat16))

    kernel = _make_level_kernel(P, H, W, C, Cout, has_res, apply_film)
    return pl.pallas_call(
        kernel,
        out_shape=jax.ShapeDtypeStruct((P, 2 * H, 2 * WCo), jnp.float32),
        grid=(1,),
        in_specs=in_specs,
        out_specs=pl.BlockSpec((P, 2 * H, 2 * WCo), lambda i: (0, 0, 0)),
        scratch_shapes=scratch,
        compiler_params=pltpu.CompilerParams(
            dimension_semantics=("arbitrary",),
            vmem_limit_bytes=50 * 1024 * 1024),
    )(*inputs)


# ----------------------------------------------------------------------------
# Models.unet_decode_film2 (trans_decoder chain) — channels-last re-expression
# ----------------------------------------------------------------------------
def unet_decode_film2(decode_feat0, residuals, scales, biases,
                      padding_mask_vision, conv_params, film_first=False):
    """
    decode_feat0: (b, t, n, H, W, C)
    residuals[l] (l>=1): (b, t, n, H_l, W_l, 16)   (already reversed, encoder order)
    scales, biases: (L, b, t, n, C)
    padding_mask_vision: (b, t) bool
    Returns (unpad, n, H_out, W_out, 16).
    """
    # TODO(synk): the padding-mask selection requires concrete shapes (eager only);
    #             a jit-compatible version would need a static-shape masked formulation.
    b, t, n, H, W, C = decode_feat0.shape
    mask = np.asarray(padding_mask_vision).reshape(-1)
    idx = np.nonzero(mask)[0]

    def sel(x_bt):  # (b, t, ...) -> (unpad, ...)
        return x_bt.reshape((b * t,) + x_bt.shape[2:])[idx]

    feat = sel(decode_feat0)                   # (unpad, n, H, W, C)
    unpad = feat.shape[0]
    P = unpad * n
    feat = feat.reshape(P, H, W * C)           # lane-dense (W, C fused into lanes)

    Cout = 16
    Hl, Wl = H, W
    for l, (w, bb) in enumerate(conv_params):
        apply_film = (l == 0) or (not film_first)
        has_res = l >= 1

        if apply_film:
            sc = jnp.tile(sel(scales[l]).reshape(P, C), (1, Wl))   # (P, Wl*C)
            bi = jnp.tile(sel(biases[l]).reshape(P, C), (1, Wl))
        else:
            sc = bi = None

        if has_res:
            res = sel(residuals[l])            # (unpad, n, Hl, Wl, 16)
            res = res.reshape(P, Hl, Wl * res.shape[-1])
        else:
            res = None

        # Host precompute: banded conv weights (feat/res halves), bias tile,
        # and the two exact bilinear-upsample matrices.
        w_np = np.asarray(w, np.float32)       # (3, 3, cin, Cout), cin = C or 2C
        wf_b = jnp.asarray(_banded_conv_weights(w_np[:, :, :C, :], Wl), jnp.bfloat16)
        wr_b = (jnp.asarray(_banded_conv_weights(w_np[:, :, C:, :], Wl), jnp.bfloat16)
                if has_res else None)
        bconv = jnp.asarray(np.tile(np.asarray(bb, np.float32), Wl).reshape(1, Wl * Cout))
        Uh = _upsample_matrix(Hl)
        Uw = _upsample_matrix(Wl)
        bd = jnp.asarray(np.kron(np.eye(P, dtype=np.float32), Uh))         # (P*2H, P*H)
        kw = jnp.asarray(np.kron(Uw.T, np.eye(Cout, dtype=np.float32)))    # (W*Co, 2W*Co)

        feat = _fused_decoder_level(feat, res, sc, bi, wf_b, wr_b, bconv, bd, kw,
                                    apply_film, Hl, Wl, C, Cout)
        Hl, Wl = 2 * Hl, 2 * Wl

    return feat.reshape(unpad, n, Hl, Wl, Cout)


# ----------------------------------------------------------------------------
# Kernel: modality-embedding fusion + emb_norm LayerNorm (cross_atten2 branch).
# Single block: interleave '(M T) -> (T M)' and the modality add happen in-kernel.
# ----------------------------------------------------------------------------
def _fuse_ln_kernel(x2_ref, x1_ref, mod_ref, g_ref, b_ref, o_ref):
    BN, T, d = x2_ref.shape
    mod0 = mod_ref[0:1, :].reshape(1, 1, d)
    mod1 = mod_ref[1:2, :].reshape(1, 1, d)
    g = g_ref[...].reshape(1, 1, d)
    b = b_ref[...].reshape(1, 1, d)

    def ln(x):
        x = x.astype(jnp.float32)
        mean = jnp.mean(x, axis=-1, keepdims=True)
        var = jnp.mean((x - mean) ** 2, axis=-1, keepdims=True)
        return (x - mean) * lax.rsqrt(var + 1e-5) * g + b

    y2 = ln(x2_ref[...] + mod0)   # modality 0: vision_attend_language (cross_feature2)
    y1 = ln(x1_ref[...] + mod1)   # modality 1: lang_attend_vision   (cross_feature)
    o_ref[:, :, 0:1, :] = y2.reshape(BN, T, 1, d).astype(o_ref.dtype)
    o_ref[:, :, 1:2, :] = y1.reshape(BN, T, 1, d).astype(o_ref.dtype)


def fuse_modalities_layernorm(vision_attend_language, lang_attend_vision,
                              mod_table, gamma, beta):
    """Reproduces:
        joint = cat([cross_feature2, cross_feature], dim=1)
        joint = rearrange(joint, 'B (M T) d -> B (T M) d', M=2)
        joint = emb_norm(joint + repeat(modality_emb(mod_id), ...))
    Inputs are (B*views, T, d)."""
    BN, T, d = lang_attend_vision.shape
    out = pl.pallas_call(
        _fuse_ln_kernel,
        out_shape=jax.ShapeDtypeStruct((BN, T, 2, d), jnp.float32),
        grid=(1,),
        in_specs=[
            pl.BlockSpec((BN, T, d), lambda i: (0, 0, 0)),
            pl.BlockSpec((BN, T, d), lambda i: (0, 0, 0)),
            pl.BlockSpec((2, d), lambda i: (0, 0)),
            pl.BlockSpec((1, d), lambda i: (0, 0)),
            pl.BlockSpec((1, d), lambda i: (0, 0)),
        ],
        out_specs=pl.BlockSpec((BN, T, 2, d), lambda i: (0, 0, 0, 0)),
        compiler_params=pltpu.CompilerParams(dimension_semantics=("arbitrary",)),
    )(vision_attend_language, lang_attend_vision, mod_table,
      gamma.reshape(1, d), beta.reshape(1, d))
    return out.reshape(BN, 2 * T, d)   # free reshape: (T, M) rows are contiguous


# ----------------------------------------------------------------------------
if __name__ == "__main__":
    key = jax.random.PRNGKey(0)
    keys = iter(jax.random.split(key, 32))

    B, T, N = 2, 2, 2          # batch, time, views
    depth = 3                  # unet decoder depth
    C0 = 16                    # unet_last_feature channels (unet_cross is None)
    Cres = 16                  # residual channels
    H0 = W0 = 8                # spatial size of unet_last_feature
    d_model = 32               # policy.d_model

    def xavier(k, shape, fan_in, fan_out):
        std = (2.0 / (fan_in + fan_out)) ** 0.5
        return std * jax.random.normal(k, shape, dtype=jnp.float32)

    # trans_decoder parameters (unet_cross is None branch):
    #   l=0: 16->16, 1..depth-1: 32->16; xavier-normal like _init_params()
    conv_params = []
    for l in range(depth):
        cin = 16 if l == 0 else 32
        cout = 16
        w = xavier(next(keys), (3, 3, cin, cout), cin * 9, cout * 9)
        bias = jnp.zeros((cout,), jnp.float32)
        conv_params.append((w, bias))

    # Synthetic outputs of the external submodules (deterministic).
    padding_mask_vision = jnp.array([[True, True], [True, False]])
    decode_feat0 = jax.random.normal(next(keys), (B, T, N, H0, W0, C0), jnp.float32)
    residuals = [None]
    for l in range(1, depth):
        s = H0 * (2 ** l)
        residuals.append(jax.random.normal(next(keys), (B, T, N, s, s, Cres),
                                           jnp.float32))
    scales = jax.random.normal(next(keys), (depth, B, T, N, C0), jnp.float32)
    biases = jax.random.normal(next(keys), (depth, B, T, N, C0), jnp.float32)

    decode_features = unet_decode_film2(
        decode_feat0, residuals, scales, biases, padding_mask_vision,
        conv_params, film_first=False)

    # cross_atten2 branch: modality embedding + emb_norm (LayerNorm) fusion.
    cross1 = jax.random.normal(next(keys), (B * N, T, d_model), jnp.float32)  # lang->vision
    cross2 = jax.random.normal(next(keys), (B * N, T, d_model), jnp.float32)  # vision->lang
    mod_table = xavier(next(keys), (2, d_model), 2, d_model)                  # modality_emb
    gamma = jnp.ones((d_model,), jnp.float32)                                 # emb_norm weight
    beta = jnp.zeros((d_model,), jnp.float32)                                 # emb_norm bias
    joint_cross_feature = fuse_modalities_layernorm(cross2, cross1, mod_table,
                                                    gamma, beta)

    jax.block_until_ready(decode_features)
    jax.block_until_ready(joint_cross_feature)

    assert decode_features.shape == (3, N, H0 * 2 ** depth, W0 * 2 ** depth, 16)
    assert joint_cross_feature.shape == (B * N, 2 * T, d_model)
    print("KERNEL_OK")
</pallas_src>

<mosaic_0001>
module attributes {stable_mosaic.version = 11 : i64} {
  func.func @kernel(%arg0: i32, %arg1: memref<6x8x128xf32, #tpu.memory_space<vmem>>, %arg2: memref<6x128xf32, #tpu.memory_space<vmem>>, %arg3: memref<6x128xf32, #tpu.memory_space<vmem>>, %arg4: memref<3x160x128xbf16, #tpu.memory_space<vmem>>, %arg5: memref<1x128xf32, #tpu.memory_space<vmem>>, %arg6: memref<96x48xf32, #tpu.memory_space<vmem>>, %arg7: memref<128x256xf32, #tpu.memory_space<vmem>>, %arg8: memref<6x16x256xf32, #tpu.memory_space<vmem>>, %arg9: memref<6x10x160xbf16, #tpu.memory_space<vmem>>) attributes {dimension_semantics = [#tpu.dimension_semantics<arbitrary>], iteration_bounds = array<i64: 1>, scalar_prefetch = 0 : i64, scratch_operands = 1 : i64, tpu.core_type = #tpu.core_type<tc>, window_params = [{pipeline_mode = #tpu.pipeline_mode<synchronous>, transform_indices = @transform_0, window_bounds = array<i64: 6, 8, 128>}, {pipeline_mode = #tpu.pipeline_mode<synchronous>, transform_indices = @transform_1, window_bounds = array<i64: 6, 128>}, {pipeline_mode = #tpu.pipeline_mode<synchronous>, transform_indices = @transform_2, window_bounds = array<i64: 6, 128>}, {pipeline_mode = #tpu.pipeline_mode<synchronous>, transform_indices = @transform_3, window_bounds = array<i64: 3, 160, 128>}, {pipeline_mode = #tpu.pipeline_mode<synchronous>, transform_indices = @transform_4, window_bounds = array<i64: 1, 128>}, {pipeline_mode = #tpu.pipeline_mode<synchronous>, transform_indices = @transform_5, window_bounds = array<i64: 96, 48>}, {pipeline_mode = #tpu.pipeline_mode<synchronous>, transform_indices = @transform_6, window_bounds = array<i64: 128, 256>}, {pipeline_mode = #tpu.pipeline_mode<synchronous>, transform_indices = @transform_7, window_bounds = array<i64: 6, 16, 256>}]} {
    %c0 = arith.constant 0 : index
    %c0_0 = arith.constant 0 : index
    %c0_1 = arith.constant 0 : index
    %0 = vector.load %arg1[%c0, %c0_0, %c0_1] : memref<6x8x128xf32, #tpu.memory_space<vmem>>, vector<6x8x128xf32>
    %c0_2 = arith.constant 0 : index
    %c0_3 = arith.constant 0 : index
    %1 = vector.load %arg2[%c0_2, %c0_3] : memref<6x128xf32, #tpu.memory_space<vmem>>, vector<6x128xf32>
    %2 = vector.shape_cast %1 : vector<6x128xf32> to vector<6x1x128xf32>
    %3 = vector.broadcast %2 : vector<6x1x128xf32> to vector<6x8x128xf32>
    %4 = arith.mulf %0, %3 : vector<6x8x128xf32>
    %c0_4 = arith.constant 0 : index
    %c0_5 = arith.constant 0 : index
    %5 = vector.load %arg3[%c0_4, %c0_5] : memref<6x128xf32, #tpu.memory_space<vmem>>, vector<6x128xf32>
    %6 = vector.shape_cast %5 : vector<6x128xf32> to vector<6x1x128xf32>
    %7 = vector.broadcast %6 : vector<6x1x128xf32> to vector<6x8x128xf32>
    %8 = arith.addf %4, %7 : vector<6x8x128xf32>
    %cst = arith.constant 0.000000e+00 : bf16
    %9 = vector.broadcast %cst : bf16 to vector<6x10x160xbf16>
    %c0_6 = arith.constant 0 : index
    %c0_7 = arith.constant 0 : index
    %c0_8 = arith.constant 0 : index
    %10 = vector.load %arg9[%c0_6, %c0_7, %c0_8] : memref<6x10x160xbf16, #tpu.memory_space<vmem>>, vector<6x10x160xbf16>
    tpu.vector_store %arg9[%c0_6, %c0_7, %c0_8], %9 {strides = array<i32>} : memref<6x10x160xbf16, #tpu.memory_space<vmem>>, vector<6x10x160xbf16>,
    %11 = arith.truncf %8 : vector<6x8x128xf32> to vector<6x8x128xbf16>
    %c0_9 = arith.constant 0 : index
    %c1 = arith.constant 1 : index
    %c16 = arith.constant 16 : index
    %12 = vector.load %arg9[%c0_9, %c1, %c16] : memref<6x10x160xbf16, #tpu.memory_space<vmem>>, vector<6x8x128xbf16>
    tpu.vector_store %arg9[%c0_9, %c1, %c16], %11 {strides = array<i32>} : memref<6x10x160xbf16, #tpu.memory_space<vmem>>, vector<6x8x128xbf16>,
    %cst_10 = arith.constant 0.000000e+00 : f32
    %13 = vector.broadcast %cst_10 : f32 to vector<48x128xf32>
    %c0_11 = arith.constant 0 : index
    %c0_12 = arith.constant 0 : index
    %c0_13 = arith.constant 0 : index
    %14 = vector.load %arg9[%c0_11, %c0_12, %c0_13] : memref<6x10x160xbf16, #tpu.memory_space<vmem>>, vector<6x8x160xbf16>
    %15 = vector.shape_cast %14 : vector<6x8x160xbf16> to vector<48x160xbf16>
    %c0_14 = arith.constant 0 : index
    %c0_15 = arith.constant 0 : index
    %c0_16 = arith.constant 0 : index
    %16 = vector.load %arg4[%c0_14, %c0_15, %c0_16] : memref<3x160x128xbf16, #tpu.memory_space<vmem>>, vector<1x160x128xbf16>
    %17 = vector.shape_cast %16 : vector<1x160x128xbf16> to vector<160x128xbf16>
    %cst_17 = arith.constant dense<0.000000e+00> : vector<48x128xf32>
    %18 = tpu.matmul %15, %17, %cst_17 {dimension_numbers = #tpu.dot_dimension_numbers<[1], [0], [0], [1], [0, 0, 1, 1], [], []>} : vector<48x160xbf16>, vector<160x128xbf16>, vector<48x128xf32> -> vector<48x128xf32>
    %19 = arith.addf %13, %18 : vector<48x128xf32>
    %c0_18 = arith.constant 0 : index
    %c1_19 = arith.constant 1 : index
    %c0_20 = arith.constant 0 : index
    %20 = vector.load %arg9[%c0_18, %c1_19, %c0_20] : memref<6x10x160xbf16, #tpu.memory_space<vmem>>, vector<6x8x160xbf16>
    %21 = vector.shape_cast %20 : vector<6x8x160xbf16> to vector<48x160xbf16>
    %c1_21 = arith.constant 1 : index
    %c0_22 = arith.constant 0 : index
    %c0_23 = arith.constant 0 : index
    %22 = vector.load %arg4[%c1_21, %c0_22, %c0_23] : memref<3x160x128xbf16, #tpu.memory_space<vmem>>, vector<1x160x128xbf16>
    %23 = vector.shape_cast %22 : vector<1x160x128xbf16> to vector<160x128xbf16>
    %cst_24 = arith.constant dense<0.000000e+00> : vector<48x128xf32>
    %24 = tpu.matmul %21, %23, %cst_24 {dimension_numbers = #tpu.dot_dimension_numbers<[1], [0], [0], [1], [0, 0, 1, 1], [], []>} : vector<48x160xbf16>, vector<160x128xbf16>, vector<48x128xf32> -> vector<48x128xf32>
    %25 = arith.addf %19, %24 : vector<48x128xf32>
    %c0_25 = arith.constant 0 : index
    %c2 = arith.constant 2 : index
    %c0_26 = arith.constant 0 : index
    %26 = vector.load %arg9[%c0_25, %c2, %c0_26] : memref<6x10x160xbf16, #tpu.memory_space<vmem>>, vector<6x8x160xbf16>
    %27 = vector.shape_cast %26 : vector<6x8x160xbf16> to vector<48x160xbf16>
    %c2_27 = arith.constant 2 : index
    %c0_28 = arith.constant 0 : index
    %c0_29 = arith.constant 0 : index
    %28 = vector.load %arg4[%c2_27, %c0_28, %c0_29] : memref<3x160x128xbf16, #tpu.memory_space<vmem>>, vector<1x160x128xbf16>
    %29 = vector.shape_cast %28 : vector<1x160x128xbf16> to vector<160x128xbf16>
    %cst_30 = arith.constant dense<0.000000e+00> : vector<48x128xf32>
    %30 = tpu.matmul %27, %29, %cst_30 {dimension_numbers = #tpu.dot_dimension_numbers<[1], [0], [0], [1], [0, 0, 1, 1], [], []>} : vector<48x160xbf16>, vector<160x128xbf16>, vector<48x128xf32> -> vector<48x128xf32>
    %31 = arith.addf %25, %30 : vector<48x128xf32>
    %c0_31 = arith.constant 0 : index
    %c0_32 = arith.constant 0 : index
    %32 = vector.load %arg5[%c0_31, %c0_32] : memref<1x128xf32, #tpu.memory_space<vmem>>, vector<1x128xf32>
    %33 = vector.broadcast %32 : vector<1x128xf32> to vector<48x128xf32>
    %34 = arith.addf %31, %33 : vector<48x128xf32>
    %cst_33 = arith.constant 0.000000e+00 : f32
    %35 = vector.broadcast %cst_33 : f32 to vector<48x128xf32>
    %36 = arith.maximumf %34, %35 : vector<48x128xf32>
    %c0_34 = arith.constant 0 : index
    %c0_35 = arith.constant 0 : index
    %37 = vector.load %arg6[%c0_34, %c0_35] : memref<96x48xf32, #tpu.memory_space<vmem>>, vector<96x48xf32>
    %cst_36 = arith.constant dense<0.000000e+00> : vector<96x128xf32>
    %38 = tpu.matmul %37, %36, %cst_36 {dimension_numbers = #tpu.dot_dimension_numbers<[1], [0], [0], [1], [0, 0, 1, 1], [], []>} : vector<96x48xf32>, vector<48x128xf32>, vector<96x128xf32> -> vector<96x128xf32>
    %c0_37 = arith.constant 0 : index
    %c0_38 = arith.constant 0 : index
    %39 = vector.load %arg7[%c0_37, %c0_38] : memref<128x256xf32, #tpu.memory_space<vmem>>, vector<128x256xf32>
    %cst_39 = arith.constant dense<0.000000e+00> : vector<96x256xf32>
    %40 = tpu.matmul %38, %39, %cst_39 {dimension_numbers = #tpu.dot_dimension_numbers<[1], [0], [0], [1], [0, 0, 1, 1], [], []>} : vector<96x128xf32>, vector<128x256xf32>, vector<96x256xf32> -> vector<96x256xf32>
    %41 = vector.shape_cast %40 : vector<96x256xf32> to vector<6x16x256xf32>
    %c0_40 = arith.constant 0 : index
    %c0_41 = arith.constant 0 : index
    %c0_42 = arith.constant 0 : index
    %42 = vector.load %arg8[%c0_40, %c0_41, %c0_42] : memref<6x16x256xf32, #tpu.memory_space<vmem>>, vector<6x16x256xf32>
    tpu.vector_store %arg8[%c0_40, %c0_41, %c0_42], %41 {strides = array<i32>} : memref<6x16x256xf32, #tpu.memory_space<vmem>>, vector<6x16x256xf32>,
    return
  }
  func.func @transform_0(%arg0: i32) -> (i32, i32, i32) {
    %c0_i32 = arith.constant 0 : i32
    %c0_i32_0 = arith.constant 0 : i32
    %c0_i32_1 = arith.constant 0 : i32
    %c0_i32_2 = arith.constant 0 : i32
    return %c0_i32, %c0_i32_0, %c0_i32_1 : i32, i32, i32
  }
  func.func @transform_1(%arg0: i32) -> (i32, i32) {
    %c0_i32 = arith.constant 0 : i32
    %c0_i32_0 = arith.constant 0 : i32
    %c0_i32_1 = arith.constant 0 : i32
    return %c0_i32, %c0_i32_0 : i32, i32
  }
  func.func @transform_2(%arg0: i32) -> (i32, i32) {
    %c0_i32 = arith.constant 0 : i32
    %c0_i32_0 = arith.constant 0 : i32
    %c0_i32_1 = arith.constant 0 : i32
    return %c0_i32, %c0_i32_0 : i32, i32
  }
  func.func @transform_3(%arg0: i32) -> (i32, i32, i32) {
    %c0_i32 = arith.constant 0 : i32
    %c0_i32_0 = arith.constant 0 : i32
    %c0_i32_1 = arith.constant 0 : i32
    %c0_i32_2 = arith.constant 0 : i32
    return %c0_i32, %c0_i32_0, %c0_i32_1 : i32, i32, i32
  }
  func.func @transform_4(%arg0: i32) -> (i32, i32) {
    %c0_i32 = arith.constant 0 : i32
    %c0_i32_0 = arith.constant 0 : i32
    %c0_i32_1 = arith.constant 0 : i32
    return %c0_i32, %c0_i32_0 : i32, i32
  }
  func.func @transform_5(%arg0: i32) -> (i32, i32) {
    %c0_i32 = arith.constant 0 : i32
    %c0_i32_0 = arith.constant 0 : i32
    %c0_i32_1 = arith.constant 0 : i32
    return %c0_i32, %c0_i32_0 : i32, i32
  }
  func.func @transform_6(%arg0: i32) -> (i32, i32) {
    %c0_i32 = arith.constant 0 : i32
    %c0_i32_0 = arith.constant 0 : i32
    %c0_i32_1 = arith.constant 0 : i32
    return %c0_i32, %c0_i32_0 : i32, i32
  }
  func.func @transform_7(%arg0: i32) -> (i32, i32, i32) {
    %c0_i32 = arith.constant 0 : i32
    %c0_i32_0 = arith.constant 0 : i32
    %c0_i32_1 = arith.constant 0 : i32
    %c0_i32_2 = arith.constant 0 : i32
    return %c0_i32, %c0_i32_0, %c0_i32_1 : i32, i32, i32
  }
}

</mosaic_0001>

<llo_original>
// kernel: tpu_custom_call.1
$region0: #{tpu_custom_call.1}
  #allocation0 [shape = 'u32[]', space=smem, size = 0x4, offset = 0x4, fixed_abs, tag = 'smem constant byte address 0x4 - core index']
  #allocation1 [shape = 'u32[72,128]{1,0:T(1,128)}', space=vmem, size = 0x9000, scoped, tag = 'internal scratch']
  #allocation2 [shape = 'bf16[6,10,160]{2,1,0:T(8,128)(2,1)}', space=vmem, size = 0xc000, scoped, tag = 'scratch operand']
  %s0 = inlined_call_operand.vmem [shape: f32[6,8,128], index: 0, kind: input, shape index: {}]
  %s1 = inlined_call_operand.vmem [shape: f32[6,128], index: 1, kind: input, shape index: {}]
  %s2 = inlined_call_operand.vmem [shape: f32[6,128], index: 2, kind: input, shape index: {}]
  %s3 = inlined_call_operand.hbm [shape: bf16[3,160,128], index: 3, kind: input, shape index: {}]
  %s4 = inlined_call_operand.vmem [shape: f32[1,128], index: 4, kind: input, shape index: {}]
  %s5 = inlined_call_operand.vmem [shape: f32[96,48], index: 5, kind: input, shape index: {}]
  %s6 = inlined_call_operand.hbm [shape: f32[128,256], index: 6, kind: input, shape index: {}]
  %s7 = inlined_call_operand.hbm [shape: f32[6,16,256], index: 7, kind: output, shape index: {}]
  %s8 = sld [smem:[#allocation0]]
  $region46: #{tpu_custom_call.1} parent=0
    _
  %s10 = ssub.s32 1, %s8
  %s11 = scalar_select 0, %s10, %s8
  $region1: #{tpu_custom_call.1} parent=0
    #allocation3 [shape = 'u8[122880]{0}', space=vmem, size = 0x1e000, scoped, tag = 'input window, operand 3, single buffered']
    #allocation4 [shape = 's32[1]{0}', space=sflag, size = 0x4, scoped, tag = 'scoped memory for tpu_custom_call.1']
    #allocation5 [shape = 's32[1]{0}', space=sflag, size = 0x4, scoped, tag = 'scoped memory for tpu_custom_call.1']
    #allocation6 [shape = 'u8[131072]{0}', space=vmem, size = 0x20000, scoped, tag = 'input window, operand 6, single buffered']
    #allocation7 [shape = 's32[1]{0}', space=sflag, size = 0x4, scoped, tag = 'scoped memory for tpu_custom_call.1']
    #allocation8 [shape = 'u8[98304]{0}', space=vmem, size = 0x18000, scoped, tag = 'output window, operand 0, single buffered']
    %12 = vsyncpa [#allocation4], 0
    %13 = vsyncpa [#allocation7], 0
    %14 = vsyncpa [#allocation5], 0
    // Predicated region
    $region2: #{tpu_custom_call.1} parent=1 // pred_check
      _
    $region3: #{tpu_custom_call.1} parent=1 // pred_check_branch
      %16 = sbr.rel (0) target = $region5
    $region4: #{tpu_custom_call.1} parent=1 // pred_region
      _
    $region5: #{tpu_custom_call.1} parent=1 // pred_fallthru
      _
    // Predicated region
    $region6: #{tpu_custom_call.1} parent=1 // pred_check
      _
    $region7: #{tpu_custom_call.1} parent=1 // pred_check_branch
      %18 = sbr.rel (0) target = $region9
    $region8: #{tpu_custom_call.1} parent=1 // pred_region
      _
    $region9: #{tpu_custom_call.1} parent=1 // pred_fallthru
      _
    // Predicated region
    $region10: #{tpu_custom_call.1} parent=1 // pred_check
      _
    $region11: #{tpu_custom_call.1} parent=1 // pred_check_branch
      %20 = sbr.rel (0) target = $region13
    $region12: #{tpu_custom_call.1} parent=1 // pred_region
      _
    $region13: #{tpu_custom_call.1} parent=1 // pred_fallthru
      _
    // Predicated region
    $region14: #{tpu_custom_call.1} parent=1 // pred_check
      _
    $region15: #{tpu_custom_call.1} parent=1 // pred_check_branch
      %22 = sbr.rel (0) target = $region17
    $region16: #{tpu_custom_call.1} parent=1 // pred_region
      %24 = vsyncadd [#allocation4], 0
      %s25 = sshll.u32 %s3, 4
      %s26 = int_to_ptr.hbm [resolvable:$true] %s25
      %s27 = sshll.u32 [#allocation3], 4
      %s28 = int_to_ptr.vmem [resolvable:$true] %s27
      %33 = dma.hbm_to_vmem [thread:$0]  %s26, 3840, %s28, [#allocation4], 64, 64, 4
    $region17: #{tpu_custom_call.1} parent=1 // pred_fallthru
      _
    // Predicated region
    $region18: #{tpu_custom_call.1} parent=1 // pred_check
      _
    $region19: #{tpu_custom_call.1} parent=1 // pred_check_branch
      %35 = sbr.rel (0) target = $region21
    $region20: #{tpu_custom_call.1} parent=1 // pred_region
      _
    $region21: #{tpu_custom_call.1} parent=1 // pred_fallthru
      _
    // Predicated region
    $region22: #{tpu_custom_call.1} parent=1 // pred_check
      _
    $region23: #{tpu_custom_call.1} parent=1 // pred_check_branch
      %37 = sbr.rel (0) target = $region25
    $region24: #{tpu_custom_call.1} parent=1 // pred_region
      _
    $region25: #{tpu_custom_call.1} parent=1 // pred_fallthru
      _
    // Predicated region
    $region26: #{tpu_custom_call.1} parent=1 // pred_check
      _
    $region27: #{tpu_custom_call.1} parent=1 // pred_check_branch
      %39 = sbr.rel (0) target = $region29
    $region28: #{tpu_custom_call.1} parent=1 // pred_region
      %41 = vsyncadd [#allocation7], 0
      %s42 = sshll.u32 %s6, 4
      %s43 = int_to_ptr.hbm [resolvable:$true] %s42
      %s44 = sshll.u32 [#allocation6], 4
      %s45 = int_to_ptr.vmem [resolvable:$true] %s44
      %50 = dma.hbm_to_vmem [thread:$0]  %s43, 4096, %s45, [#allocation7], 256, 256, 16
    $region29: #{tpu_custom_call.1} parent=1 // pred_fallthru
      _
    // Predicated region
    $region30: #{tpu_custom_call.1} parent=1 // pred_check
      _
    $region31: #{tpu_custom_call.1} parent=1 // pred_check_branch
      %52 = sbr.rel (0) target = $region33
    $region32: #{tpu_custom_call.1} parent=1 // pred_region
      %54 = dma.done [#allocation4], 3840
    $region33: #{tpu_custom_call.1} parent=1 // pred_fallthru
      _
    // Predicated region
    $region34: #{tpu_custom_call.1} parent=1 // pred_check
      _
    $region35: #{tpu_custom_call.1} parent=1 // pred_check_branch
      %56 = sbr.rel (0) target = $region37
    $region36: #{tpu_custom_call.1} parent=1 // pred_region
      %58 = dma.done [#allocation7], 4096
    $region37: #{tpu_custom_call.1} parent=1 // pred_fallthru
      _
    %v60 = vld [vmem:[%s0] sm:$0xff]
    %v61 = vld [vmem:[%s0 + $0x8] sm:$0xff]
    %v62 = vld [vmem:[%s0 + $0x10] sm:$0xff]
    %v63 = vld [vmem:[%s0 + $0x18] sm:$0xff]
    %v64 = vld [vmem:[%s0 + $0x20] sm:$0xff]
    %v65 = vld [vmem:[%s0 + $0x28] sm:$0xff]
    %v66 = vld [vmem:[%s1] sm:$0x3f]
    %v68 = vrot.slane %v66, 1
    %v69 = vrot.slane %v66, 2
    %v70 = vrot.slane %v66, 3
    %v71 = vrot.slane %v66, 4
    %v72 = vrot.slane %v66, 5
    %v73 = vperm.slane %v66, 0
    %v74 = vperm.slane %v68, 0
    %v75 = vperm.slane %v69, 0
    %v76 = vperm.slane %v70, 0
    %v77 = vperm.slane %v71, 0
    %v78 = vperm.slane %v72, 0
    %v85 = vmul.f32 %v60, %v73
    %v86 = vmul.f32 %v61, %v74
    %v87 = vmul.f32 %v62, %v75
    %v88 = vmul.f32 %v63, %v76
    %v89 = vmul.f32 %v64, %v77
    %v90 = vmul.f32 %v65, %v78
    %v91 = vld [vmem:[%s2] sm:$0x3f]
    %v93 = vrot.slane %v91, 1
    %v94 = vrot.slane %v91, 2
    %v95 = vrot.slane %v91, 3
    %v96 = vrot.slane %v91, 4
    %v97 = vrot.slane %v91, 5
    %v98 = vperm.slane %v91, 0
    %v99 = vperm.slane %v93, 0
    %v100 = vperm.slane %v94, 0
    %v101 = vperm.slane %v95, 0
    %v102 = vperm.slane %v96, 0
    %v103 = vperm.slane %v97, 0
    %v110 = vadd.f32 %v85, %v98
    %v111 = vadd.f32 %v86, %v99
    %v112 = vadd.f32 %v87, %v100
    %v113 = vadd.f32 %v88, %v101
    %v114 = vadd.f32 %v89, %v102
    %v115 = vadd.f32 %v90, %v103
    %vm116 = vcmask 1043456
    %vm117 = vcmask 261124
    %vm118 = vmor %vm117, %vm116
    %119 = vst.msk [vmem:[#allocation2] sm:$0xff] %vm118, 0
    %vm120 = vcmask 1040384
    %vm121 = vcmask 258052
    %vm122 = vmor %vm121, %vm120
    %123 = vst.msk [vmem:[#allocation2 + $0x8] sm:$0x11] %vm122, 0
    %124 = vst.msk [vmem:[#allocation2 + $0x10] sm:$0xff] %vm118, 0
    %125 = vst.msk [vmem:[#allocation2 + $0x18] sm:$0x11] %vm122, 0
    %126 = vst.msk [vmem:[#allocation2 + $0x20] sm:$0xff] %vm118, 0
    %127 = vst.msk [vmem:[#allocation2 + $0x28] sm:$0x11] %vm122, 0
    %128 = vst.msk [vmem:[#allocation2 + $0x30] sm:$0xff] %vm118, 0
    %129 = vst.msk [vmem:[#allocation2 + $0x38] sm:$0x11] %vm122, 0
    %130 = vst.msk [vmem:[#allocation2 + $0x40] sm:$0xff] %vm118, 0
    %131 = vst.msk [vmem:[#allocation2 + $0x48] sm:$0x11] %vm122, 0
    %132 = vst.msk [vmem:[#allocation2 + $0x50] sm:$0xff] %vm118, 0
    %133 = vst.msk [vmem:[#allocation2 + $0x58] sm:$0x11] %vm122, 0
    %v134 = vpack.c.bf16 %v110, %v110
    %v135 = vpack.c.bf16 %v111, %v111
    %v136 = vpack.c.bf16 %v112, %v112
    %v137 = vpack.c.bf16 %v113, %v113
    %v138 = vpack.c.bf16 %v114, %v114
    %v139 = vpack.c.bf16 %v115, %v115
    %v141 = vshrl.u32 %v134, 16
    %v143 = vrot.slane %v141, 7
    %v144 = vshll.u32 %v134, 16
    %v146 = vor.u32 %v143, %v144
    %v147 = vrot.slane %v143, 4
    %v149 = vshrl.u32 %v135, 16
    %v151 = vrot.slane %v149, 7
    %v152 = vshll.u32 %v135, 16
    %v154 = vor.u32 %v151, %v152
    %v155 = vrot.slane %v151, 4
    %v157 = vshrl.u32 %v136, 16
    %v159 = vrot.slane %v157, 7
    %v160 = vshll.u32 %v136, 16
    %v162 = vor.u32 %v159, %v160
    %v163 = vrot.slane %v159, 4
    %v165 = vshrl.u32 %v137, 16
    %v167 = vrot.slane %v165, 7
    %v168 = vshll.u32 %v137, 16
    %v170 = vor.u32 %v167, %v168
    %v171 = vrot.slane %v167, 4
    %v173 = vshrl.u32 %v138, 16
    %v175 = vrot.slane %v173, 7
    %v176 = vshll.u32 %v138, 16
    %v178 = vor.u32 %v175, %v176
    %v179 = vrot.slane %v175, 4
    %v181 = vshrl.u32 %v139, 16
    %v183 = vrot.slane %v181, 7
    %v184 = vshll.u32 %v139, 16
    %v186 = vor.u32 %v183, %v184
    %v187 = vrot.slane %v183, 4
    %188 = vrot.lane.b32.xlu0 %v146, 16
    %v189 = vpop.permute.xlu0 %188
    %190 = vrot.lane.b32.xlu0 %v147, 16
    %v191 = vpop.permute.xlu0 %190
    %192 = vrot.lane.b32.xlu0 %v154, 16
    %v193 = vpop.permute.xlu0 %192
    %194 = vrot.lane.b32.xlu0 %v155, 16
    %v195 = vpop.permute.xlu0 %194
    %196 = vrot.lane.b32.xlu0 %v162, 16
    %v197 = vpop.permute.xlu0 %196
    %198 = vrot.lane.b32.xlu0 %v163, 16
    %v199 = vpop.permute.xlu0 %198
    %200 = vrot.lane.b32.xlu0 %v170, 16
    %v201 = vpop.permute.xlu0 %200
    %202 = vrot.lane.b32.xlu0 %v171, 16
    %v203 = vpop.permute.xlu0 %202
    %204 = vrot.lane.b32.xlu0 %v178, 16
    %v205 = vpop.permute.xlu0 %204
    %206 = vrot.lane.b32.xlu0 %v179, 16
    %v207 = vpop.permute.xlu0 %206
    %208 = vrot.lane.b32.xlu0 %v186, 16
    %v209 = vpop.permute.xlu0 %208
    %210 = vrot.lane.b32.xlu0 %v187, 16
    %v211 = vpop.permute.xlu0 %210
    %v212 = vrot.slane %v189, 4
    %v213 = vrot.slane %v191, 4
    %v214 = vrot.slane %v193, 4
    %v215 = vrot.slane %v195, 4
    %v216 = vrot.slane %v197, 4
    %v217 = vrot.slane %v199, 4
    %v218 = vrot.slane %v201, 4
    %v219 = vrot.slane %v203, 4
    %v220 = vrot.slane %v205, 4
    %v221 = vrot.slane %v207, 4
    %v222 = vrot.slane %v209, 4
    %v223 = vrot.slane %v211, 4
    %vm224 = vcmask 130048
    %v225 = vsel %vm224, %v212, %v189
    %v226 = vsel %vm224, %v213, %v191
    %v227 = vsel %vm224, %v214, %v193
    %v228 = vsel %vm224, %v215, %v195
    %v229 = vsel %vm224, %v216, %v197
    %v230 = vsel %vm224, %v217, %v199
    %v231 = vsel %vm224, %v218, %v201
    %v232 = vsel %vm224, %v219, %v203
    %v233 = vsel %vm224, %v220, %v205
    %v234 = vsel %vm224, %v221, %v207
    %v235 = vsel %vm224, %v222, %v209
    %v236 = vsel %vm224, %v223, %v211
    %vm249 = vcmask 1043584
    %vm250 = vsmask.f32 7938
    %vm251 = vmand %vm249, %vm250
    %vm252 = vcmask 130052
    %vm253 = vsmask.f32 7954
    %vm254 = vmand %vm252, %vm253
    %vm255 = vmor %vm254, %vm251
    %v256 = vld [vmem:[#allocation2] sm:$0xff]
    %v257 = vsel %vm255, %v225, %v256
    %258 = vst [vmem:[#allocation2] sm:$0xff] %v257
    %vm259 = vcmask 1040512
    %vm260 = vsmask.f32 256
    %vm261 = vmand %vm259, %vm260
    %vm262 = vcmask 126980
    %vm263 = vsmask.f32 4352
    %vm264 = vmand %vm262, %vm263
    %vm265 = vmor %vm264, %vm261
    %v266 = vld [vmem:[#allocation2 + $0x8] sm:$0x11]
    %v267 = vsel %vm265, %v226, %v266
    %268 = vst [vmem:[#allocation2 + $0x8] sm:$0x11] %v267
    %v269 = vld [vmem:[#allocation2 + $0x10] sm:$0xff]
    %v270 = vsel %vm255, %v227, %v269
    %271 = vst [vmem:[#allocation2 + $0x10] sm:$0xff] %v270
    %v272 = vld [vmem:[#allocation2 + $0x18] sm:$0x11]
    %v273 = vsel %vm265, %v228, %v272
    %274 = vst [vmem:[#allocation2 + $0x18] sm:$0x11] %v273
    %v275 = vld [vmem:[#allocation2 + $0x20] sm:$0xff]
    %v276 = vsel %vm255, %v229, %v275
    %277 = vst [vmem:[#allocation2 + $0x20] sm:$0xff] %v276
    %v278 = vld [vmem:[#allocation2 + $0x28] sm:$0x11]
    %v279 = vsel %vm265, %v230, %v278
    %280 = vst [vmem:[#allocation2 + $0x28] sm:$0x11] %v279
    %v281 = vld [vmem:[#allocation2 + $0x30] sm:$0xff]
    %v282 = vsel %vm255, %v231, %v281
    %283 = vst [vmem:[#allocation2 + $0x30] sm:$0xff] %v282
    %v284 = vld [vmem:[#allocation2 + $0x38] sm:$0x11]
    %v285 = vsel %vm265, %v232, %v284
    %286 = vst [vmem:[#allocation2 + $0x38] sm:$0x11] %v285
    %v287 = vld [vmem:[#allocation2 + $0x40] sm:$0xff]
    %v288 = vsel %vm255, %v233, %v287
    %289 = vst [vmem:[#allocation2 + $0x40] sm:$0xff] %v288
    %v290 = vld [vmem:[#allocation2 + $0x48] sm:$0x11]
    %v291 = vsel %vm265, %v234, %v290
    %292 = vst [vmem:[#allocation2 + $0x48] sm:$0x11] %v291
    %v293 = vld [vmem:[#allocation2 + $0x50] sm:$0xff]
    %v294 = vsel %vm255, %v235, %v293
    %295 = vst [vmem:[#allocation2 + $0x50] sm:$0xff] %v294
    %v296 = vld [vmem:[#allocation2 + $0x58] sm:$0x11]
    %v297 = vsel %vm265, %v236, %v296
    %298 = vst [vmem:[#allocation2 + $0x58] sm:$0x11] %v297
    %v299 = vld [vmem:[#allocation2] sm:$0xff]
    %v300 = vld [vmem:[#allocation2 + $0x10] sm:$0xff]
    %v301 = vld [vmem:[#allocation2 + $0x20] sm:$0xff]
    %v302 = vld [vmem:[#allocation2 + $0x30] sm:$0xff]
    %v303 = vld [vmem:[#allocation2 + $0x40] sm:$0xff]
    %v304 = vld [vmem:[#allocation2 + $0x50] sm:$0xff]
    %v305 = vld [vmem:[#allocation3] sm:$0xf]
    %v306 = vld [vmem:[#allocation3 + $0x4] sm:$0xf]
    %v307 = vld [vmem:[#allocation3 + $0x8] sm:$0xf]
    %v308 = vld [vmem:[#allocation3 + $0xc] sm:$0xf]
    %v309 = vld [vmem:[#allocation3 + $0x10] sm:$0xf]
    %v310 = vld [vmem:[#allocation3 + $0x14] sm:$0xf]
    %v311 = vld [vmem:[#allocation3 + $0x18] sm:$0xf]
    %v312 = vld [vmem:[#allocation3 + $0x1c] sm:$0xf]
    %v313 = vld [vmem:[#allocation3 + $0x20] sm:$0xf]
    %v314 = vld [vmem:[#allocation3 + $0x24] sm:$0xf]
    %v315 = vld [vmem:[#allocation3 + $0x28] sm:$0xf]
    %v316 = vld [vmem:[#allocation3 + $0x2c] sm:$0xf]
    %v317 = vld [vmem:[#allocation3 + $0x30] sm:$0xf]
    %v318 = vld [vmem:[#allocation3 + $0x34] sm:$0xf]
    %v319 = vld [vmem:[#allocation3 + $0x38] sm:$0xf]
    %v320 = vld [vmem:[#allocation3 + $0x3c] sm:$0xf]
    %v321 = vld [vmem:[#allocation3 + $0x40] sm:$0xf]
    %v322 = vld [vmem:[#allocation3 + $0x44] sm:$0xf]
    %v323 = vld [vmem:[#allocation3 + $0x48] sm:$0xf]
    %v324 = vld [vmem:[#allocation3 + $0x4c] sm:$0xf]
    %v325 = vld [vmem:[#allocation2 + $0x8] sm:$0x11]
    %v326 = vld [vmem:[#allocation2 + $0x18] sm:$0x11]
    %v327 = vld [vmem:[#allocation2 + $0x28] sm:$0x11]
    %v328 = vld [vmem:[#allocation2 + $0x38] sm:$0x11]
    %v329 = vld [vmem:[#allocation2 + $0x48] sm:$0x11]
    %v330 = vld [vmem:[#allocation2 + $0x58] sm:$0x11]
    %vm331 = vsmask.f32 3328
    %vm332 = vsmask.f32 7440
    %vm333 = vmor %vm331, %vm332
    %v335 = vshrl.u32 %v299, 16
    %v337 = vrot.slane %v335, 4
    %v338 = vshll.u32 %v299, 16
    %v340 = vrot.slane %v338, 5
    %v341 = vor.u32 %v337, %v340
    %v342 = vrot.slane %v341, 4
    %v344 = vshll.u32 %v325, 16
    %v346 = vrot.slane %v344, 5
    %v347 = vsel %vm333, %v342, %v346
    %v349 = vshrl.u32 %v300, 16
    %v351 = vrot.slane %v349, 4
    %v352 = vshll.u32 %v300, 16
    %v354 = vrot.slane %v352, 5
    %v355 = vor.u32 %v351, %v354
    %v356 = vrot.slane %v355, 4
    %v358 = vshll.u32 %v326, 16
    %v360 = vrot.slane %v358, 5
    %v361 = vsel %vm333, %v356, %v360
    %v363 = vshrl.u32 %v301, 16
    %v365 = vrot.slane %v363, 4
    %v366 = vshll.u32 %v301, 16
    %v368 = vrot.slane %v366, 5
    %v369 = vor.u32 %v365, %v368
    %v370 = vrot.slane %v369, 4
    %v372 = vshll.u32 %v327, 16
    %v374 = vrot.slane %v372, 5
    %v375 = vsel %vm333, %v370, %v374
    %v377 = vshrl.u32 %v302, 16
    %v379 = vrot.slane %v377, 4
    %v380 = vshll.u32 %v302, 16
    %v382 = vrot.slane %v380, 5
    %v383 = vor.u32 %v379, %v382
    %v384 = vrot.slane %v383, 4
    %v386 = vshll.u32 %v328, 16
    %v388 = vrot.slane %v386, 5
    %v389 = vsel %vm333, %v384, %v388
    %v391 = vshrl.u32 %v303, 16
    %v393 = vrot.slane %v391, 4
    %v394 = vshll.u32 %v303, 16
    %v396 = vrot.slane %v394, 5
    %v397 = vor.u32 %v393, %v396
    %v398 = vrot.slane %v397, 4
    %v400 = vshll.u32 %v329, 16
    %v402 = vrot.slane %v400, 5
    %v403 = vsel %vm333, %v398, %v402
    %v405 = vshrl.u32 %v304, 16
    %v407 = vrot.slane %v405, 4
    %v408 = vshll.u32 %v304, 16
    %v410 = vrot.slane %v408, 5
    %v411 = vor.u32 %v407, %v410
    %v412 = vrot.slane %v411, 4
    %v414 = vshll.u32 %v330, 16
    %v416 = vrot.slane %v414, 5
    %v417 = vsel %vm333, %v412, %v416
    %s418 = scalar_lea.vmem [#allocation3], 80
    %v419 = vld [vmem:[%s418] sm:$0xf]
    %v420 = vld [vmem:[%s418 + $0x4] sm:$0xf]
    %v421 = vld [vmem:[%s418 + $0x8] sm:$0xf]
    %v422 = vld [vmem:[%s418 + $0xc] sm:$0xf]
    %v423 = vld [vmem:[%s418 + $0x10] sm:$0xf]
    %v424 = vld [vmem:[%s418 + $0x14] sm:$0xf]
    %v425 = vld [vmem:[%s418 + $0x18] sm:$0xf]
    %v426 = vld [vmem:[%s418 + $0x1c] sm:$0xf]
    %v427 = vld [vmem:[%s418 + $0x20] sm:$0xf]
    %v428 = vld [vmem:[%s418 + $0x24] sm:$0xf]
    %v429 = vld [vmem:[%s418 + $0x28] sm:$0xf]
    %v430 = vld [vmem:[%s418 + $0x2c] sm:$0xf]
    %v431 = vld [vmem:[%s418 + $0x30] sm:$0xf]
    %v432 = vld [vmem:[%s418 + $0x34] sm:$0xf]
    %v433 = vld [vmem:[%s418 + $0x38] sm:$0xf]
    %v434 = vld [vmem:[%s418 + $0x3c] sm:$0xf]
    %v435 = vld [vmem:[%s418 + $0x40] sm:$0xf]
    %v436 = vld [vmem:[%s418 + $0x44] sm:$0xf]
    %v437 = vld [vmem:[%s418 + $0x48] sm:$0xf]
    %v438 = vld [vmem:[%s418 + $0x4c] sm:$0xf]
    %v439 = vunpack.c.l.b16 %v347
    %v440 = vunpack.c.h.b16 %v347
    %v441 = vunpack.c.l.b16 %v361
    %v442 = vunpack.c.h.b16 %v361
    %v443 = vunpack.c.l.b16 %v375
    %v444 = vunpack.c.h.b16 %v375
    %v445 = vunpack.c.l.b16 %v389
    %v446 = vunpack.c.h.b16 %v389
    %v447 = vunpack.c.l.b16 %v403
    %v448 = vunpack.c.h.b16 %v403
    %v449 = vunpack.c.l.b16 %v417
    %v450 = vunpack.c.h.b16 %v417
    %v451 = vpack.c.b16 %v441, %v439
    %v452 = vpack.c.b16 %v442, %v440
    %v453 = vpack.c.b16 %v445, %v443
    %v454 = vpack.c.b16 %v446, %v444
    %v455 = vpack.c.b16 %v449, %v447
    %v456 = vpack.c.b16 %v450, %v448
    %v480 = vunpack.c.l.b16 %v419
    %v481 = vunpack.c.l.b16 %v420
    %v482 = vunpack.c.l.b16 %v421
    %v483 = vunpack.c.l.b16 %v422
    %v484 = vunpack.c.l.b16 %v423
    %v485 = vunpack.c.l.b16 %v424
    %v486 = vunpack.c.l.b16 %v425
    %v487 = vunpack.c.l.b16 %v426
    %v488 = vunpack.c.l.b16 %v427
    %v489 = vunpack.c.l.b16 %v428
    %v490 = vunpack.c.l.b16 %v429
    %v491 = vunpack.c.l.b16 %v430
    %v492 = vunpack.c.l.b16 %v431
    %v493 = vunpack.c.l.b16 %v432
    %v494 = vunpack.c.l.b16 %v433
    %v495 = vunpack.c.l.b16 %v434
    %v496 = vunpack.c.l.b16 %v435
    %v497 = vunpack.c.l.b16 %v436
    %v498 = vunpack.c.l.b16 %v437
    %v499 = vunpack.c.l.b16 %v438
    %v500 = vpack.c.b16 %v481, %v480
    %v501 = vpack.c.b16 %v483, %v482
    %v502 = vpack.c.b16 %v485, %v484
    %v503 = vpack.c.b16 %v487, %v486
    %v504 = vpack.c.b16 %v489, %v488
    %v505 = vpack.c.b16 %v491, %v490
    %v506 = vpack.c.b16 %v493, %v492
    %v507 = vpack.c.b16 %v495, %v494
    %v508 = vpack.c.b16 %v497, %v496
    %v509 = vpack.c.b16 %v499, %v498
    %vm520 = vcmask 261120
    %v522 = vsel %vm520, %v452, 0
    %v525 = vsel %vm520, %v454, 0
    %v528 = vsel %vm520, %v456, 0
    %530 = vmatpush.bf16.msra.mxu0 %v507
    %531 = vmatpush.bf16.msra.mxu0 %v506
    %532 = vmatpush.bf16.msra.mxu0 %v505
    %533 = vmatpush.bf16.msra.mxu0 %v504
    %534 = vmatpush.bf16.msra.mxu0 %v503
    %535 = vmatpush.bf16.msra.mxu0 %v502
    %536 = vmatpush.bf16.msra.mxu0 %v501
    %537 = vmatpush.bf16.msra.mxu0 %v500
    %538 = vmatmul.bf16.gmra.mxu0 %v451
    %v539 = vpop.f32.mrf.mxu0
    %v540 = vadd.f32 0.0, %v539
    %v541 = vpop.f32.mrf.mxu0
    %v542 = vadd.f32 0.0, %v541
    %543 = vmatmul.bf16.gmra.mxu0 %v453
    %v544 = vpop.f32.mrf.mxu0
    %v545 = vadd.f32 0.0, %v544
    %v546 = vpop.f32.mrf.mxu0
    %v547 = vadd.f32 0.0, %v546
    %548 = vmatmul.bf16.gmra.mxu0 %v455
    %v549 = vpop.f32.mrf.mxu0
    %v550 = vadd.f32 0.0, %v549
    %v551 = vpop.f32.mrf.mxu0
    %v552 = vadd.f32 0.0, %v551
    %553 = vdwg.mxu0
    %554 = vmatpush.bf16.msra.mxu0 0
    %555 = vmatpush.bf16.msra.mxu0 0
    %556 = vmatpush.bf16.msra.mxu0 0
    %557 = vmatpush.bf16.msra.mxu0 0
    %558 = vmatpush.bf16.msra.mxu0 0
    %559 = vmatpush.bf16.msra.mxu0 0
    %560 = vmatpush.bf16.msra.mxu0 %v509
    %561 = vmatpush.bf16.msra.mxu0 %v508
    %562 = vmatmul.bf16.gmra.mxu0 %v522
    %v563 = vpop.f32.mrf.mxu0
    %v564 = vadd.f32 %v540, %v563
    %v565 = vpop.f32.mrf.mxu0
    %v566 = vadd.f32 %v542, %v565
    %567 = vmatmul.bf16.gmra.mxu0 %v525
    %v568 = vpop.f32.mrf.mxu0
    %v569 = vadd.f32 %v545, %v568
    %v570 = vpop.f32.mrf.mxu0
    %v571 = vadd.f32 %v547, %v570
    %572 = vmatmul.bf16.gmra.mxu0 %v528
    %v573 = vpop.f32.mrf.mxu0
    %v574 = vadd.f32 %v550, %v573
    %v575 = vpop.f32.mrf.mxu0
    %v576 = vadd.f32 %v552, %v575
    %577 = vdwg.mxu0
    %v584 = vunpack.c.l.b16 %v299
    %v585 = vunpack.c.h.b16 %v299
    %v586 = vunpack.c.l.b16 %v300
    %v587 = vunpack.c.h.b16 %v300
    %v588 = vunpack.c.l.b16 %v301
    %v589 = vunpack.c.h.b16 %v301
    %v590 = vunpack.c.l.b16 %v302
    %v591 = vunpack.c.h.b16 %v302
    %v592 = vunpack.c.l.b16 %v303
    %v593 = vunpack.c.h.b16 %v303
    %v594 = vunpack.c.l.b16 %v304
    %v595 = vunpack.c.h.b16 %v304
    %v596 = vpack.c.b16 %v586, %v584
    %v597 = vpack.c.b16 %v587, %v585
    %v598 = vpack.c.b16 %v590, %v588
    %v599 = vpack.c.b16 %v591, %v589
    %v600 = vpack.c.b16 %v594, %v592
    %v601 = vpack.c.b16 %v595, %v593
    %v625 = vunpack.c.l.b16 %v305
    %v626 = vunpack.c.l.b16 %v306
    %v627 = vunpack.c.l.b16 %v307
    %v628 = vunpack.c.l.b16 %v308
    %v629 = vunpack.c.l.b16 %v309
    %v630 = vunpack.c.l.b16 %v310
    %v631 = vunpack.c.l.b16 %v311
    %v632 = vunpack.c.l.b16 %v312
    %v633 = vunpack.c.l.b16 %v313
    %v634 = vunpack.c.l.b16 %v314
    %v635 = vunpack.c.l.b16 %v315
    %v636 = vunpack.c.l.b16 %v316
    %v637 = vunpack.c.l.b16 %v317
    %v638 = vunpack.c.l.b16 %v318
    %v639 = vunpack.c.l.b16 %v319
    %v640 = vunpack.c.l.b16 %v320
    %v641 = vunpack.c.l.b16 %v321
    %v642 = vunpack.c.l.b16 %v322
    %v643 = vunpack.c.l.b16 %v323
    %v644 = vunpack.c.l.b16 %v324
    %v645 = vpack.c.b16 %v626, %v625
    %v646 = vpack.c.b16 %v628, %v627
    %v647 = vpack.c.b16 %v630, %v629
    %v648 = vpack.c.b16 %v632, %v631
    %v649 = vpack.c.b16 %v634, %v633
    %v650 = vpack.c.b16 %v636, %v635
    %v651 = vpack.c.b16 %v638, %v637
    %v652 = vpack.c.b16 %v640, %v639
    %v653 = vpack.c.b16 %v642, %v641
    %v654 = vpack.c.b16 %v644, %v643
    %v666 = vsel %vm520, %v597, 0
    %v669 = vsel %vm520, %v599, 0
    %v672 = vsel %vm520, %v601, 0
    %674 = vmatpush.bf16.msra.mxu0 %v652
    %675 = vmatpush.bf16.msra.mxu0 %v651
    %676 = vmatpush.bf16.msra.mxu0 %v650
    %677 = vmatpush.bf16.msra.mxu0 %v649
    %678 = vmatpush.bf16.msra.mxu0 %v648
    %679 = vmatpush.bf16.msra.mxu0 %v647
    %680 = vmatpush.bf16.msra.mxu0 %v646
    %681 = vmatpush.bf16.msra.mxu0 %v645
    %682 = vmatmul.bf16.gmra.mxu0 %v596
    %v683 = vpop.f32.mrf.mxu0
    %v684 = vadd.f32 %v564, %v683
    %v685 = vpop.f32.mrf.mxu0
    %v686 = vadd.f32 %v566, %v685
    %687 = vmatmul.bf16.gmra.mxu0 %v598
    %v688 = vpop.f32.mrf.mxu0
    %v689 = vadd.f32 %v569, %v688
    %v690 = vpop.f32.mrf.mxu0
    %v691 = vadd.f32 %v571, %v690
    %692 = vmatmul.bf16.gmra.mxu0 %v600
    %v693 = vpop.f32.mrf.mxu0
    %v694 = vadd.f32 %v574, %v693
    %v695 = vpop.f32.mrf.mxu0
    %v696 = vadd.f32 %v576, %v695
    %697 = vdwg.mxu0
    %698 = vmatpush.bf16.msra.mxu0 0
    %699 = vmatpush.bf16.msra.mxu0 0
    %700 = vmatpush.bf16.msra.mxu0 0
    %701 = vmatpush.bf16.msra.mxu0 0
    %702 = vmatpush.bf16.msra.mxu0 0
    %703 = vmatpush.bf16.msra.mxu0 0
    %704 = vmatpush.bf16.msra.mxu0 %v654
    %705 = vmatpush.bf16.msra.mxu0 %v653
    %706 = vmatmul.bf16.gmra.mxu0 %v666
    %v707 = vpop.f32.mrf.mxu0
    %v708 = vadd.f32 %v684, %v707
    %v709 = vpop.f32.mrf.mxu0
    %v710 = vadd.f32 %v686, %v709
    %711 = vmatmul.bf16.gmra.mxu0 %v669
    %v712 = vpop.f32.mrf.mxu0
    %v713 = vadd.f32 %v689, %v712
    %v714 = vpop.f32.mrf.mxu0
    %v715 = vadd.f32 %v691, %v714
    %716 = vmatmul.bf16.gmra.mxu0 %v672
    %v717 = vpop.f32.mrf.mxu0
    %v718 = vadd.f32 %v694, %v717
    %v719 = vpop.f32.mrf.mxu0
    %v720 = vadd.f32 %v696, %v719
    %721 = vdwg.mxu0
    %v722 = vld [vmem:[#allocation2] sm:$0xee]
    %v723 = vld [vmem:[#allocation2 + $0x10] sm:$0xee]
    %v724 = vld [vmem:[#allocation2 + $0x20] sm:$0xee]
    %v725 = vld [vmem:[#allocation2 + $0x30] sm:$0xee]
    %v726 = vld [vmem:[#allocation2 + $0x40] sm:$0xee]
    %v727 = vld [vmem:[#allocation2 + $0x50] sm:$0xee]
    %vm740 = vcmask 1042432
    %vm741 = vcmask 1046532
    %vm742 = vmor %vm740, %vm741
    %v743 = vrot.slane %v722, 5
    %v744 = vrot.slane %v743, 4
    %v745 = vrot.slane %v325, 5
    %v746 = vsel %vm742, %v744, %v745
    %v747 = vrot.slane %v723, 5
    %v748 = vrot.slane %v747, 4
    %v749 = vrot.slane %v326, 5
    %v750 = vsel %vm742, %v748, %v749
    %v751 = vrot.slane %v724, 5
    %v752 = vrot.slane %v751, 4
    %v753 = vrot.slane %v327, 5
    %v754 = vsel %vm742, %v752, %v753
    %v755 = vrot.slane %v725, 5
    %v756 = vrot.slane %v755, 4
    %v757 = vrot.slane %v328, 5
    %v758 = vsel %vm742, %v756, %v757
    %v759 = vrot.slane %v726, 5
    %v760 = vrot.slane %v759, 4
    %v761 = vrot.slane %v329, 5
    %v762 = vsel %vm742, %v760, %v761
    %v763 = vrot.slane %v727, 5
    %v764 = vrot.slane %v763, 4
    %v765 = vrot.slane %v330, 5
    %v766 = vsel %vm742, %v764, %v765
    %s767 = scalar_lea.vmem [#allocation3], 160
    %v768 = vld [vmem:[%s767] sm:$0xf]
    %v769 = vld [vmem:[%s767 + $0x4] sm:$0xf]
    %v770 = vld [vmem:[%s767 + $0x8] sm:$0xf]
    %v771 = vld [vmem:[%s767 + $0xc] sm:$0xf]
    %v772 = vld [vmem:[%s767 + $0x10] sm:$0xf]
    %v773 = vld [vmem:[%s767 + $0x14] sm:$0xf]
    %v774 = vld [vmem:[%s767 + $0x18] sm:$0xf]
    %v775 = vld [vmem:[%s767 + $0x1c] sm:$0xf]
    %v776 = vld [vmem:[%s767 + $0x20] sm:$0xf]
    %v777 = vld [vmem:[%s767 + $0x24] sm:$0xf]
    %v778 = vld [vmem:[%s767 + $0x28] sm:$0xf]
    %v779 = vld [vmem:[%s767 + $0x2c] sm:$0xf]
    %v780 = vld [vmem:[%s767 + $0x30] sm:$0xf]
    %v781 = vld [vmem:[%s767 + $0x34] sm:$0xf]
    %v782 = vld [vmem:[%s767 + $0x38] sm:$0xf]
    %v783 = vld [vmem:[%s767 + $0x3c] sm:$0xf]
    %v784 = vld [vmem:[%s767 + $0x40] sm:$0xf]
    %v785 = vld [vmem:[%s767 + $0x44] sm:$0xf]
    %v786 = vld [vmem:[%s767 + $0x48] sm:$0xf]
    %v787 = vld [vmem:[%s767 + $0x4c] sm:$0xf]
    %v788 = vunpack.c.l.b16 %v746
    %v789 = vunpack.c.h.b16 %v746
    %v790 = vunpack.c.l.b16 %v750
    %v791 = vunpack.c.h.b16 %v750
    %v792 = vunpack.c.l.b16 %v754
    %v793 = vunpack.c.h.b16 %v754
    %v794 = vunpack.c.l.b16 %v758
    %v795 = vunpack.c.h.b16 %v758
    %v796 = vunpack.c.l.b16 %v762
    %v797 = vunpack.c.h.b16 %v762
    %v798 = vunpack.c.l.b16 %v766
    %v799 = vunpack.c.h.b16 %v766
    %v800 = vpack.c.b16 %v790, %v788
    %v801 = vpack.c.b16 %v791, %v789
    %v802 = vpack.c.b16 %v794, %v792
    %v803 = vpack.c.b16 %v795, %v793
    %v804 = vpack.c.b16 %v798, %v796
    %v805 = vpack.c.b16 %v799, %v797
    %v829 = vunpack.c.l.b16 %v768
    %v830 = vunpack.c.l.b16 %v769
    %v831 = vunpack.c.l.b16 %v770
    %v832 = vunpack.c.l.b16 %v771
    %v833 = vunpack.c.l.b16 %v772
    %v834 = vunpack.c.l.b16 %v773
    %v835 = vunpack.c.l.b16 %v774
    %v836 = vunpack.c.l.b16 %v775
    %v837 = vunpack.c.l.b16 %v776
    %v838 = vunpack.c.l.b16 %v777
    %v839 = vunpack.c.l.b16 %v778
    %v840 = vunpack.c.l.b16 %v779
    %v841 = vunpack.c.l.b16 %v780
    %v842 = vunpack.c.l.b16 %v781
    %v843 = vunpack.c.l.b16 %v782
    %v844 = vunpack.c.l.b16 %v783
    %v845 = vunpack.c.l.b16 %v784
    %v846 = vunpack.c.l.b16 %v785
    %v847 = vunpack.c.l.b16 %v786
    %v848 = vunpack.c.l.b16 %v787
    %v849 = vpack.c.b16 %v830, %v829
    %v850 = vpack.c.b16 %v832, %v831
    %v851 = vpack.c.b16 %v834, %v833
    %v852 = vpack.c.b16 %v836, %v835
    %v853 = vpack.c.b16 %v838, %v837
    %v854 = vpack.c.b16 %v840, %v839
    %v855 = vpack.c.b16 %v842, %v841
    %v856 = vpack.c.b16 %v844, %v843
    %v857 = vpack.c.b16 %v846, %v845
    %v858 = vpack.c.b16 %v848, %v847
    %v870 = vsel %vm520, %v801, 0
    %v873 = vsel %vm520, %v803, 0
    %v876 = vsel %vm520, %v805, 0
    %878 = vmatpush.bf16.msra.mxu0 %v856
    %879 = vmatpush.bf16.msra.mxu0 %v855
    %880 = vmatpush.bf16.msra.mxu0 %v854
    %881 = vmatpush.bf16.msra.mxu0 %v853
    %882 = vmatpush.bf16.msra.mxu0 %v852
    %883 = vmatpush.bf16.msra.mxu0 %v851
    %884 = vmatpush.bf16.msra.mxu0 %v850
    %885 = vmatpush.bf16.msra.mxu0 %v849
    %886 = vmatmul.bf16.gmra.mxu0 %v800
    %v887 = vpop.f32.mrf.mxu0
    %v888 = vadd.f32 0.0, %v887
    %v889 = vpop.f32.mrf.mxu0
    %v890 = vadd.f32 0.0, %v889
    %891 = vmatmul.bf16.gmra.mxu0 %v802
    %v892 = vpop.f32.mrf.mxu0
    %v893 = vadd.f32 0.0, %v892
    %v894 = vpop.f32.mrf.mxu0
    %v895 = vadd.f32 0.0, %v894
    %896 = vmatmul.bf16.gmra.mxu0 %v804
    %v897 = vpop.f32.mrf.mxu0
    %v898 = vadd.f32 0.0, %v897
    %v899 = vpop.f32.mrf.mxu0
    %v900 = vadd.f32 0.0, %v899
    %901 = vdwg.mxu0
    %902 = vmatpush.bf16.msra.mxu0 0
    %903 = vmatpush.bf16.msra.mxu0 0
    %904 = vmatpush.bf16.msra.mxu0 0
    %905 = vmatpush.bf16.msra.mxu0 0
    %906 = vmatpush.bf16.msra.mxu0 0
    %907 = vmatpush.bf16.msra.mxu0 0
    %908 = vmatpush.bf16.msra.mxu0 %v858
    %909 = vmatpush.bf16.msra.mxu0 %v857
    %910 = vmatmul.bf16.gmra.mxu0 %v870
    %v911 = vpop.f32.mrf.mxu0
    %v912 = vadd.f32 %v888, %v911
    %v913 = vpop.f32.mrf.mxu0
    %v914 = vadd.f32 %v890, %v913
    %915 = vmatmul.bf16.gmra.mxu0 %v873
    %v916 = vpop.f32.mrf.mxu0
    %v917 = vadd.f32 %v893, %v916
    %v918 = vpop.f32.mrf.mxu0
    %v919 = vadd.f32 %v895, %v918
    %920 = vmatmul.bf16.gmra.mxu0 %v876
    %v921 = vpop.f32.mrf.mxu0
    %v922 = vadd.f32 %v898, %v921
    %v923 = vpop.f32.mrf.mxu0
    %v924 = vadd.f32 %v900, %v923
    %925 = vdwg.mxu0
    %v926 = vadd.f32 %v708, %v912
    %v927 = vadd.f32 %v710, %v914
    %v928 = vadd.f32 %v713, %v917
    %v929 = vadd.f32 %v715, %v919
    %v930 = vadd.f32 %v718, %v922
    %v931 = vadd.f32 %v720, %v924
    %v932 = vld [vmem:[%s4] sm:$0x1]
    %v934 = vperm.slane %v932, 0
    %v936 = vadd.f32 %v926, %v934
    %v937 = vadd.f32 %v927, %v934
    %v938 = vadd.f32 %v928, %v934
    %v939 = vadd.f32 %v929, %v934
    %v940 = vadd.f32 %v930, %v934
    %v941 = vadd.f32 %v931, %v934
    %v942 = vmax.f32 %v936, 0.0
    %v943 = vmax.f32 %v937, 0.0
    %v944 = vmax.f32 %v938, 0.0
    %v945 = vmax.f32 %v939, 0.0
    %v946 = vmax.f32 %v940, 0.0
    %v947 = vmax.f32 %v941, 0.0
    %v948 = vld [vmem:[%s5] sm:$0xff]
    %v949 = vld [vmem:[%s5 + $0x8] sm:$0xff]
    %v950 = vld [vmem:[%s5 + $0x10] sm:$0xff]
    %v951 = vld [vmem:[%s5 + $0x18] sm:$0xff]
    %v952 = vld [vmem:[%s5 + $0x20] sm:$0xff]
    %v953 = vld [vmem:[%s5 + $0x28] sm:$0xff]
    %v954 = vld [vmem:[%s5 + $0x30] sm:$0xff]
    %v955 = vld [vmem:[%s5 + $0x38] sm:$0xff]
    %v956 = vld [vmem:[%s5 + $0x40] sm:$0xff]
    %v957 = vld [vmem:[%s5 + $0x48] sm:$0xff]
    %v958 = vld [vmem:[%s5 + $0x50] sm:$0xff]
    %v959 = vld [vmem:[%s5 + $0x58] sm:$0xff]
    %vm960 = vcmask 392192
    %v962 = vsel %vm960, %v948, 0
    %v965 = vsel %vm960, %v949, 0
    %v968 = vsel %vm960, %v950, 0
    %v971 = vsel %vm960, %v951, 0
    %v974 = vsel %vm960, %v952, 0
    %v977 = vsel %vm960, %v953, 0
    %v980 = vsel %vm960, %v954, 0
    %v983 = vsel %vm960, %v955, 0
    %v986 = vsel %vm960, %v956, 0
    %v989 = vsel %vm960, %v957, 0
    %v992 = vsel %vm960, %v958, 0
    %v995 = vsel %vm960, %v959, 0
    %997 = vmatpush.msra.mxu0 0.0
    %998 = vmatpush.msra.mxu0 0.0
    %999 = vmatpush.msra.mxu0 0.0
    %1000 = vmatpush.msra.mxu0 0.0
    %1001 = vmatpush.msra.mxu0 0.0
    %1002 = vmatpush.msra.mxu0 0.0
    %1003 = vmatpush.msra.mxu0 0.0
    %1004 = vmatpush.msra.mxu0 0.0
    %1005 = vmatpush.msra.mxu0 0.0
    %1006 = vmatpush.msra.mxu0 0.0
    %1007 = vmatpush.msra.mxu0 %v947
    %1008 = vmatpush.msra.mxu0 %v946
    %1009 = vmatpush.msra.mxu0 %v945
    %1010 = vmatpush.msra.mxu0 %v944
    %1011 = vmatpush.msra.mxu0 %v943
    %1012 = vmatpush.msra.mxu0 %v942
    %1013 = vmatmul.f32.gmra.mxu0 %v962
    %v1014 = vpop.f32.mrf.mxu0
    %v1015 = vadd.f32 0.0, %v1014
    %1016 = vmatmul.f32.gmra.mxu0 %v965
    %v1017 = vpop.f32.mrf.mxu0
    %v1018 = vadd.f32 0.0, %v1017
    %1019 = vmatmul.f32.gmra.mxu0 %v968
    %v1020 = vpop.f32.mrf.mxu0
    %v1021 = vadd.f32 0.0, %v1020
    %1022 = vmatmul.f32.gmra.mxu0 %v971
    %v1023 = vpop.f32.mrf.mxu0
    %v1024 = vadd.f32 0.0, %v1023
    %1025 = vmatmul.f32.gmra.mxu0 %v974
    %v1026 = vpop.f32.mrf.mxu0
    %v1027 = vadd.f32 0.0, %v1026
    %1028 = vmatmul.f32.gmra.mxu0 %v977
    %v1029 = vpop.f32.mrf.mxu0
    %v1030 = vadd.f32 0.0, %v1029
    %1031 = vmatmul.f32.gmra.mxu0 %v980
    %v1032 = vpop.f32.mrf.mxu0
    %v1033 = vadd.f32 0.0, %v1032
    %1034 = vmatmul.f32.gmra.mxu0 %v983
    %v1035 = vpop.f32.mrf.mxu0
    %v1036 = vadd.f32 0.0, %v1035
    %1037 = vmatmul.f32.gmra.mxu0 %v986
    %v1038 = vpop.f32.mrf.mxu0
    %v1039 = vadd.f32 0.0, %v1038
    %1040 = vmatmul.f32.gmra.mxu0 %v989
    %v1041 = vpop.f32.mrf.mxu0
    %v1042 = vadd.f32 0.0, %v1041
    %1043 = vmatmul.f32.gmra.mxu0 %v992
    %v1044 = vpop.f32.mrf.mxu0
    %v1045 = vadd.f32 0.0, %v1044
    %1046 = vmatmul.f32.gmra.mxu0 %v995
    %v1047 = vpop.f32.mrf.mxu0
    %v1048 = vadd.f32 0.0, %v1047
    %1049 = vdwg.mxu0
    %v1050 = vld [vmem:[#allocation6] sm:$0xff]
    %v1051 = vld [vmem:[#allocation6 + $0x8] sm:$0xff]
    %v1052 = vld [vmem:[#allocation6 + $0x10] sm:$0xff]
    %v1053 = vld [vmem:[#allocation6 + $0x18] sm:$0xff]
    %v1054 = vld [vmem:[#allocation6 + $0x20] sm:$0xff]
    %v1055 = vld [vmem:[#allocation6 + $0x28] sm:$0xff]
    %v1056 = vld [vmem:[#allocation6 + $0x30] sm:$0xff]
    %v1057 = vld [vmem:[#allocation6 + $0x38] sm:$0xff]
    %v1058 = vld [vmem:[#allocation6 + $0x40] sm:$0xff]
    %v1059 = vld [vmem:[#allocation6 + $0x48] sm:$0xff]
    %v1060 = vld [vmem:[#allocation6 + $0x50] sm:$0xff]
    %v1061 = vld [vmem:[#allocation6 + $0x58] sm:$0xff]
    %v1062 = vld [vmem:[#allocation6 + $0x60] sm:$0xff]
    %v1063 = vld [vmem:[#allocation6 + $0x68] sm:$0xff]
    %v1064 = vld [vmem:[#allocation6 + $0x70] sm:$0xff]
    %v1065 = vld [vmem:[#allocation6 + $0x78] sm:$0xff]
    %v1066 = vld [vmem:[#allocation6 + $0x80] sm:$0xff]
    %v1067 = vld [vmem:[#allocation6 + $0x88] sm:$0xff]
    %v1068 = vld [vmem:[#allocation6 + $0x90] sm:$0xff]
    %v1069 = vld [vmem:[#allocation6 + $0x98] sm:$0xff]
    %v1070 = vld [vmem:[#allocation6 + $0xa0] sm:$0xff]
    %v1071 = vld [vmem:[#allocation6 + $0xa8] sm:$0xff]
    %v1072 = vld [vmem:[#allocation6 + $0xb0] sm:$0xff]
    %v1073 = vld [vmem:[#allocation6 + $0xb8] sm:$0xff]
    %v1074 = vld [vmem:[#allocation6 + $0xc0] sm:$0xff]
    %v1075 = vld [vmem:[#allocation6 + $0xc8] sm:$0xff]
    %v1076 = vld [vmem:[#allocation6 + $0xd0] sm:$0xff]
    %v1077 = vld [vmem:[#allocation6 + $0xd8] sm:$0xff]
    %v1078 = vld [vmem:[#allocation6 + $0xe0] sm:$0xff]
    %v1079 = vld [vmem:[#allocation6 + $0xe8] sm:$0xff]
    %v1080 = vld [vmem:[#allocation6 + $0xf0] sm:$0xff]
    %v1081 = vld [vmem:[#allocation6 + $0xf8] sm:$0xff]
    %1082 = vmatpush.msra.mxu0 %v1080
    %1083 = vmatpush.msra.mxu0 %v1078
    %1084 = vmatpush.msra.mxu0 %v1076
    %1085 = vmatpush.msra.mxu0 %v1074
    %1086 = vmatpush.msra.mxu0 %v1072
    %1087 = vmatpush.msra.mxu0 %v1070
    %1088 = vmatpush.msra.mxu0 %v1068
    %1089 = vmatpush.msra.mxu0 %v1066
    %1090 = vmatpush.msra.mxu0 %v1064
    %1091 = vmatpush.msra.mxu0 %v1062
    %1092 = vmatpush.msra.mxu0 %v1060
    %1093 = vmatpush.msra.mxu0 %v1058
    %1094 = vmatpush.msra.mxu0 %v1056
    %1095 = vmatpush.msra.mxu0 %v1054
    %1096 = vmatpush.msra.mxu0 %v1052
    %1097 = vmatpush.msra.mxu0 %v1050
    %1098 = vmatmul.f32.gmra.mxu0 %v1015
    %v1099 = vpop.f32.mrf.mxu0
    %v1100 = vadd.f32 0.0, %v1099
    %1101 = vmatmul.f32.gmra.mxu0 %v1018
    %v1102 = vpop.f32.mrf.mxu0
    %v1103 = vadd.f32 0.0, %v1102
    %1104 = vmatmul.f32.gmra.mxu0 %v1021
    %v1105 = vpop.f32.mrf.mxu0
    %v1106 = vadd.f32 0.0, %v1105
    %1107 = vmatmul.f32.gmra.mxu0 %v1024
    %v1108 = vpop.f32.mrf.mxu0
    %v1109 = vadd.f32 0.0, %v1108
    %1110 = vmatmul.f32.gmra.mxu0 %v1027
    %v1111 = vpop.f32.mrf.mxu0
    %v1112 = vadd.f32 0.0, %v1111
    %1113 = vmatmul.f32.gmra.mxu0 %v1030
    %v1114 = vpop.f32.mrf.mxu0
    %v1115 = vadd.f32 0.0, %v1114
    %1116 = vmatmul.f32.gmra.mxu0 %v1033
    %v1117 = vpop.f32.mrf.mxu0
    %v1118 = vadd.f32 0.0, %v1117
    %1119 = vmatmul.f32.gmra.mxu0 %v1036
    %v1120 = vpop.f32.mrf.mxu0
    %v1121 = vadd.f32 0.0, %v1120
    %1122 = vmatmul.f32.gmra.mxu0 %v1039
    %v1123 = vpop.f32.mrf.mxu0
    %v1124 = vadd.f32 0.0, %v1123
    %1125 = vmatmul.f32.gmra.mxu0 %v1042
    %v1126 = vpop.f32.mrf.mxu0
    %v1127 = vadd.f32 0.0, %v1126
    %1128 = vmatmul.f32.gmra.mxu0 %v1045
    %v1129 = vpop.f32.mrf.mxu0
    %v1130 = vadd.f32 0.0, %v1129
    %1131 = vmatmul.f32.gmra.mxu0 %v1048
    %v1132 = vpop.f32.mrf.mxu0
    %v1133 = vadd.f32 0.0, %v1132
    %1134 = vdwg.mxu0
    %1135 = vmatpush.msra.mxu0 %v1081
    %1136 = vmatpush.msra.mxu0 %v1079
    %1137 = vmatpush.msra.mxu0 %v1077
    %1138 = vmatpush.msra.mxu0 %v1075
    %1139 = vmatpush.msra.mxu0 %v1073
    %1140 = vmatpush.msra.mxu0 %v1071
    %1141 = vmatpush.msra.mxu0 %v1069
    %1142 = vmatpush.msra.mxu0 %v1067
    %1143 = vmatpush.msra.mxu0 %v1065
    %1144 = vmatpush.msra.mxu0 %v1063
    %1145 = vmatpush.msra.mxu0 %v1061
    %1146 = vmatpush.msra.mxu0 %v1059
    %1147 = vmatpush.msra.mxu0 %v1057
    %1148 = vmatpush.msra.mxu0 %v1055
    %1149 = vmatpush.msra.mxu0 %v1053
    %1150 = vmatpush.msra.mxu0 %v1051
    %1151 = vmatmul.f32.gmra.mxu0 %v1015
    %v1152 = vpop.f32.mrf.mxu0
    %v1153 = vadd.f32 0.0, %v1152
    %1154 = vmatmul.f32.gmra.mxu0 %v1018
    %v1155 = vpop.f32.mrf.mxu0
    %v1156 = vadd.f32 0.0, %v1155
    %1157 = vmatmul.f32.gmra.mxu0 %v1021
    %v1158 = vpop.f32.mrf.mxu0
    %v1159 = vadd.f32 0.0, %v1158
    %1160 = vmatmul.f32.gmra.mxu0 %v1024
    %v1161 = vpop.f32.mrf.mxu0
    %v1162 = vadd.f32 0.0, %v1161
    %1163 = vmatmul.f32.gmra.mxu0 %v1027
    %v1164 = vpop.f32.mrf.mxu0
    %v1165 = vadd.f32 0.0, %v1164
    %1166 = vmatmul.f32.gmra.mxu0 %v1030
    %v1167 = vpop.f32.mrf.mxu0
    %v1168 = vadd.f32 0.0, %v1167
    %1169 = vmatmul.f32.gmra.mxu0 %v1033
    %v1170 = vpop.f32.mrf.mxu0
    %v1171 = vadd.f32 0.0, %v1170
    %1172 = vmatmul.f32.gmra.mxu0 %v1036
    %v1173 = vpop.f32.mrf.mxu0
    %v1174 = vadd.f32 0.0, %v1173
    %1175 = vmatmul.f32.gmra.mxu0 %v1039
    %v1176 = vpop.f32.mrf.mxu0
    %v1177 = vadd.f32 0.0, %v1176
    %1178 = vmatmul.f32.gmra.mxu0 %v1042
    %v1179 = vpop.f32.mrf.mxu0
    %v1180 = vadd.f32 0.0, %v1179
    %1181 = vmatmul.f32.gmra.mxu0 %v1045
    %v1182 = vpop.f32.mrf.mxu0
    %v1183 = vadd.f32 0.0, %v1182
    %1184 = vmatmul.f32.gmra.mxu0 %v1048
    %v1185 = vpop.f32.mrf.mxu0
    %v1186 = vadd.f32 0.0, %v1185
    %1187 = vdwg.mxu0
    %1188 = vst [vmem:[#allocation8] sm:$0xff] %v1100
    %1189 = vst [vmem:[#allocation8 + $0x8] sm:$0xff] %v1153
    %1190 = vst [vmem:[#allocation8 + $0x10] sm:$0xff] %v1103
    %1191 = vst [vmem:[#allocation8 + $0x18] sm:$0xff] %v1156
    %1192 = vst [vmem:[#allocation8 + $0x20] sm:$0xff] %v1106
    %1193 = vst [vmem:[#allocation8 + $0x28] sm:$0xff] %v1159
    %1194 = vst [vmem:[#allocation8 + $0x30] sm:$0xff] %v1109
    %1195 = vst [vmem:[#allocation8 + $0x38] sm:$0xff] %v1162
    %1196 = vst [vmem:[#allocation8 + $0x40] sm:$0xff] %v1112
    %1197 = vst [vmem:[#allocation8 + $0x48] sm:$0xff] %v1165
    %1198 = vst [vmem:[#allocation8 + $0x50] sm:$0xff] %v1115
    %1199 = vst [vmem:[#allocation8 + $0x58] sm:$0xff] %v1168
    %1200 = vst [vmem:[#allocation8 + $0x60] sm:$0xff] %v1118
    %1201 = vst [vmem:[#allocation8 + $0x68] sm:$0xff] %v1171
    %1202 = vst [vmem:[#allocation8 + $0x70] sm:$0xff] %v1121
    %1203 = vst [vmem:[#allocation8 + $0x78] sm:$0xff] %v1174
    %1204 = vst [vmem:[#allocation8 + $0x80] sm:$0xff] %v1124
    %1205 = vst [vmem:[#allocation8 + $0x88] sm:$0xff] %v1177
    %1206 = vst [vmem:[#allocation8 + $0x90] sm:$0xff] %v1127
    %1207 = vst [vmem:[#allocation8 + $0x98] sm:$0xff] %v1180
    %1208 = vst [vmem:[#allocation8 + $0xa0] sm:$0xff] %v1130
    %1209 = vst [vmem:[#allocation8 + $0xa8] sm:$0xff] %v1183
    %1210 = vst [vmem:[#allocation8 + $0xb0] sm:$0xff] %v1133
    %1211 = vst [vmem:[#allocation8 + $0xb8] sm:$0xff] %v1186
    // Predicated region
    $region38: #{tpu_custom_call.1} parent=1 // pred_check
      _
    $region39: #{tpu_custom_call.1} parent=1 // pred_check_branch
      %1213 = sbr.rel (0) target = $region41
    $region40: #{tpu_custom_call.1} parent=1 // pred_region
      %1215 = vsyncadd [#allocation5], 0
      %s1216 = sshll.u32 [#allocation8], 4
      %s1217 = int_to_ptr.vmem [resolvable:$true] %s1216
      %s1218 = sshll.u32 %s7, 4
      %s1219 = int_to_ptr.hbm [resolvable:$true] %s1218
      %1224 = dma.vmem_to_hbm [thread:$0]  %s1217, 3072, %s1219, [#allocation5], 256, 256, 16
    $region41: #{tpu_custom_call.1} parent=1 // pred_fallthru
      _
    // Predicated region
    $region42: #{tpu_custom_call.1} parent=1 // pred_check
      _
    $region43: #{tpu_custom_call.1} parent=1 // pred_check_branch
      %1226 = sbr.rel (0) target = $region45
    $region44: #{tpu_custom_call.1} parent=1 // pred_region
      %1228 = dma.done [#allocation5], 3072
    $region45: #{tpu_custom_call.1} parent=1 // pred_fallthru
      _
    %1229 = vsyncpa [#allocation4], 1
    %1230 = vsyncpa [#allocation7], 1
    %1231 = vsyncpa [#allocation5], 1

</llo_original>
